<compile_context>
chip_gen: v6e
topology: v6e:2x2x1
jax: 0.10.0
libtpu: 0.0.40
codegen_flags: <defaults>
</compile_context>

<pallas_src>
import jax
import jax.numpy as jnp
from jax.experimental import pallas as pl
from jax.experimental.pallas import tpu as pltpu

# ---- config (synthetic, matches module structure) ---------------------------
FEATURE_DIM = 64        # config.DATASET.FEATURE_DIM
CLF_DIM = 16            # config.DATASET.CLF_DIM
ATT_IM_DIM = 256        # fixed constant in the module
BATCH = 8

ROW_TILE = 4096                     # rows of x per grid step (multiple of 128)
_VMEM_LIMIT = 32 * 1024 * 1024      # explicit; v5e scoped default is only 16 MiB


def _round_up(x, m):
    return (x + m - 1) // m * m


def _pick_tile(n, row_tile):
    """Row-tile size.

    Small n: a single whole-array block (block dims == array dims -> always a
    legal BlockSpec, grid of 1).  Large n: a multiple of 128 (the tile is the
    LAST dim of the transposed, lane-dense output blocks) capped at ceil(n/2)
    so there are at least two 'parallel' grid steps for v7x's two TensorCores.
    """
    assert row_tile % 128 == 0
    if n <= 256:
        return n
    return min(row_tile, _round_up(pl.cdiv(n, 2), 128))


# ---- in-kernel math ----------------------------------------------------------
def _att_tail(h, w2_col, b2):
    """h: (ATT_IM_DIM, tile_n) f32 hidden with bias already added."""
    h = jnp.maximum(h, 0.0)
    # fc2 has a single output: VPU multiply + sublane reduce instead of an MXU
    # pass with only 1 active row.
    # TODO(synk): on v6e/v7x this elementwise chain could run in bf16 on the
    # VPU (~2x fewer bundles); kept f32 so it is v5e-safe.
    y = jnp.sum(h * w2_col, axis=0, keepdims=True) + b2      # (1, tile_n)
    return jax.nn.sigmoid(y)


def clf_kernel(x_ref, wc_ref, bc_ref, o_ref):
    xb = x_ref[...].astype(jnp.bfloat16)                      # (tile_n, F)
    z = jnp.dot(wc_ref[...], xb.T, preferred_element_type=jnp.float32)
    o_ref[...] = (z + bc_ref[...]).astype(o_ref.dtype)        # (CLF_DIM, tile_n)


def att_kernel(x_ref, w1_ref, b1_ref, w2_ref, b2_ref, o_ref):
    xb = x_ref[...].astype(jnp.bfloat16)
    h = jnp.dot(w1_ref[...], xb.T, preferred_element_type=jnp.float32) + b1_ref[...]
    o_ref[...] = _att_tail(h, w2_ref[...], b2_ref[0, 0]).astype(o_ref.dtype)


def fused_kernel(x_ref, w_ref, bc_ref, b1_ref, w2_ref, b2_ref,
                 clf_ref, att_ref):
    # Both heads off one streamed x tile and ONE concatenated-weight MXU pass.
    xb = x_ref[...].astype(jnp.bfloat16)                      # (tile_n, F)
    z = jnp.dot(w_ref[...], xb.T,
                preferred_element_type=jnp.float32)           # (16+256, tile_n)
    clf_ref[...] = (z[:CLF_DIM] + bc_ref[...]).astype(clf_ref.dtype)
    h = z[CLF_DIM:] + b1_ref[...]
    att_ref[...] = _att_tail(h, w2_ref[...], b2_ref[0, 0]).astype(att_ref.dtype)


# ---- BlockSpec helpers -------------------------------------------------------
def _x_spec(tile_n):
    # x tiled along rows, full along the (64-wide) feature dim
    return pl.BlockSpec((tile_n, FEATURE_DIM), lambda i: (i, 0))


def _resident(shape):
    # whole array, same block every grid step -> stays VMEM-resident.
    # TODO(synk): pipeline_mode=pl.Buffered(1) would drop the useless second
    # buffer for these constant blocks; left at the default for portability.
    return pl.BlockSpec(shape, lambda i: (0,) * len(shape))


def _col_out_spec(rows, tile_n):
    # transposed (feature-major) output: lane-dense stores, index_map (0, i)
    return pl.BlockSpec((rows, tile_n), lambda i: (0, i))


_SMEM_SPEC = pl.BlockSpec(memory_space=pltpu.MemorySpace.SMEM)   # (1,1) att bias


def _compiler_params():
    return pltpu.CompilerParams(
        dimension_semantics=("parallel",),   # row axis shards across TCs (v7x)
        vmem_limit_bytes=_VMEM_LIMIT,
    )


# ---- wrappers ----------------------------------------------------------------
def clf_forward(x, wc, bc, *, row_tile=ROW_TILE):
    n = x.shape[0]
    tile_n = _pick_tile(n, row_tile)
    cost = pl.CostEstimate(
        flops=2 * n * FEATURE_DIM * CLF_DIM,
        transcendentals=0,
        bytes_accessed=(n * FEATURE_DIM * x.dtype.itemsize
                        + FEATURE_DIM * CLF_DIM * 2 + CLF_DIM * 4
                        + n * CLF_DIM * 4),
    )
    out = pl.pallas_call(
        clf_kernel,
        out_shape=jax.ShapeDtypeStruct((CLF_DIM, n), jnp.float32),
        grid=(pl.cdiv(n, tile_n),),
        in_specs=[_x_spec(tile_n),
                  _resident((CLF_DIM, FEATURE_DIM)),
                  _resident((CLF_DIM, 1))],
        out_specs=_col_out_spec(CLF_DIM, tile_n),
        compiler_params=_compiler_params(),
        cost_estimate=cost,
    )(x, wc, bc)
    return out.T                                   # (n, CLF_DIM)


def att_forward(x, w1, b1, w2, b2, *, row_tile=ROW_TILE):
    n = x.shape[0]
    tile_n = _pick_tile(n, row_tile)
    cost = pl.CostEstimate(
        flops=2 * n * FEATURE_DIM * ATT_IM_DIM + 4 * n * ATT_IM_DIM,
        transcendentals=n,
        bytes_accessed=(n * FEATURE_DIM * x.dtype.itemsize
                        + FEATURE_DIM * ATT_IM_DIM * 2 + ATT_IM_DIM * 8 + 4
                        + n * 4),
    )
    out = pl.pallas_call(
        att_kernel,
        out_shape=jax.ShapeDtypeStruct((1, n), jnp.float32),
        grid=(pl.cdiv(n, tile_n),),
        in_specs=[_x_spec(tile_n),
                  _resident((ATT_IM_DIM, FEATURE_DIM)),
                  _resident((ATT_IM_DIM, 1)),
                  _resident((ATT_IM_DIM, 1)),
                  _SMEM_SPEC],
        out_specs=_col_out_spec(1, tile_n),
        compiler_params=_compiler_params(),
        cost_estimate=cost,
    )(x, w1, b1, w2, b2)
    return out.T                                   # (n, 1)


def fused_forward(x, w_cat, bc, b1, w2, b2, *, row_tile=ROW_TILE):
    n = x.shape[0]
    tile_n = _pick_tile(n, row_tile)
    cost = pl.CostEstimate(
        flops=2 * n * FEATURE_DIM * (CLF_DIM + ATT_IM_DIM) + 4 * n * ATT_IM_DIM,
        transcendentals=n,
        bytes_accessed=(n * FEATURE_DIM * x.dtype.itemsize
                        + FEATURE_DIM * (CLF_DIM + ATT_IM_DIM) * 2
                        + (CLF_DIM + 2 * ATT_IM_DIM) * 4 + 4
                        + n * (CLF_DIM + 1) * 4),
    )
    clf_out, att_out = pl.pallas_call(
        fused_kernel,
        out_shape=(jax.ShapeDtypeStruct((CLF_DIM, n), jnp.float32),
                   jax.ShapeDtypeStruct((1, n), jnp.float32)),
        grid=(pl.cdiv(n, tile_n),),
        in_specs=[_x_spec(tile_n),
                  _resident((CLF_DIM + ATT_IM_DIM, FEATURE_DIM)),
                  _resident((CLF_DIM, 1)),
                  _resident((ATT_IM_DIM, 1)),
                  _resident((ATT_IM_DIM, 1)),
                  _SMEM_SPEC],
        out_specs=(_col_out_spec(CLF_DIM, tile_n), _col_out_spec(1, tile_n)),
        compiler_params=_compiler_params(),
        cost_estimate=cost,
    )(x, w_cat, bc, b1, w2, b2)
    return clf_out.T, att_out.T


# ---- model -------------------------------------------------------------------
class WSALModelPallas:
    """JAX/Pallas equivalent of WSAL_Model.forward(x, mode)."""

    def __init__(self, key):
        k = jax.random.split(key, 6)
        bf = 1.0 / (FEATURE_DIM ** 0.5)
        bi = 1.0 / (ATT_IM_DIM ** 0.5)
        # Clf_Head params (PyTorch (out, in) layout; bf16 MXU operands)
        self.clf_w = jax.random.uniform(k[0], (CLF_DIM, FEATURE_DIM),
                                        jnp.float32, -bf, bf).astype(jnp.bfloat16)
        self.clf_b = jax.random.uniform(k[1], (CLF_DIM, 1), jnp.float32, -bf, bf)
        # Att_Head params
        self.att_w1 = jax.random.uniform(k[2], (ATT_IM_DIM, FEATURE_DIM),
                                         jnp.float32, -bf, bf).astype(jnp.bfloat16)
        self.att_b1 = jax.random.uniform(k[3], (ATT_IM_DIM, 1), jnp.float32, -bf, bf)
        # fc2 weight stored f32 as a column (no per-step cast, VPU reduce)
        self.att_w2 = jax.random.uniform(k[4], (ATT_IM_DIM, 1), jnp.float32, -bi, bi)
        self.att_b2 = jax.random.uniform(k[5], (1, 1), jnp.float32, -bi, bi)
        # concatenated weight for the fused path: one MXU pass per tile
        self.w_cat = jnp.concatenate([self.clf_w, self.att_w1], axis=0)

    def __call__(self, x, mode):
        if mode == 'clf':
            return clf_forward(x, self.clf_w, self.clf_b)
        elif mode == 'att':
            return att_forward(x, self.att_w1, self.att_b1,
                               self.att_w2, self.att_b2)
        # (PyTorch forward returns None for other modes)
        return None

    def forward_both(self, x):
        """Fused path: both heads off one streamed x (reads x from HBM once)."""
        return fused_forward(x, self.w_cat, self.clf_b, self.att_b1,
                             self.att_w2, self.att_b2)


# ---- pure-JAX references (same bf16 operands / f32 accumulation) --------------
def clf_reference(x, wc, bc):
    xb = x.astype(jnp.bfloat16)
    return jnp.dot(xb, wc.T, preferred_element_type=jnp.float32) + bc.reshape(1, -1)


def att_reference(x, w1, b1, w2, b2):
    xb = x.astype(jnp.bfloat16)
    h = jnp.maximum(jnp.dot(xb, w1.T, preferred_element_type=jnp.float32)
                    + b1.reshape(1, -1), 0.0)
    y = jnp.sum(h * w2.reshape(1, -1), axis=-1, keepdims=True) + b2.reshape(1, 1)
    return jax.nn.sigmoid(y)


if __name__ == "__main__":
    key = jax.random.PRNGKey(0)
    kx, kx2, kp = jax.random.split(key, 3)
    model = WSALModelPallas(kp)

    def check(x, atol=2e-3):
        y_clf = model(x, 'clf')
        y_att = model(x, 'att')
        y_clf_f, y_att_f = model.forward_both(x)
        jax.block_until_ready((y_clf, y_att, y_clf_f, y_att_f))
        n = x.shape[0]
        assert y_clf.shape == (n, CLF_DIM)
        assert y_att.shape == (n, 1)
        r_clf = clf_reference(x, model.clf_w, model.clf_b)
        r_att = att_reference(x, model.att_w1, model.att_b1,
                              model.att_w2, model.att_b2)
        assert jnp.allclose(y_clf, r_clf, atol=atol), "clf mismatch"
        assert jnp.allclose(y_att, r_att, atol=atol), "att mismatch"
        assert jnp.allclose(y_clf_f, r_clf, atol=atol), "fused clf mismatch"
        assert jnp.allclose(y_att_f, r_att, atol=atol), "fused att mismatch"

    # small batch (matches the synthetic config): single whole-array block
    check(jax.random.normal(kx, (BATCH, FEATURE_DIM), jnp.float32))
    # larger ragged N: multi-step row-tiled grid + masked ragged last block
    check(jax.random.normal(kx2, (600, FEATURE_DIM), jnp.float32))

    # other modes return None, like the PyTorch forward
    assert model(jax.random.normal(kx, (BATCH, FEATURE_DIM), jnp.float32), 'other') is None

    print("KERNEL_OK")
</pallas_src>

<mosaic_0001>
module attributes {stable_mosaic.version = 11 : i64} {
  func.func @clf_kernel(%arg0: i32, %arg1: memref<8x64xf32, #tpu.memory_space<vmem>>, %arg2: memref<16x64xbf16, #tpu.memory_space<vmem>>, %arg3: memref<16x1xf32, #tpu.memory_space<vmem>>, %arg4: memref<16x8xf32, #tpu.memory_space<vmem>>) attributes {dimension_semantics = [#tpu.dimension_semantics<parallel>], iteration_bounds = array<i64: 1>, scalar_prefetch = 0 : i64, scratch_operands = 0 : i64, tpu.core_type = #tpu.core_type<tc>, window_params = [{transform_indices = @transform_0, window_bounds = array<i64: 8, 64>}, {pipeline_mode = #tpu.pipeline_mode<synchronous>, transform_indices = @transform_1, window_bounds = array<i64: 16, 64>}, {pipeline_mode = #tpu.pipeline_mode<synchronous>, transform_indices = @transform_2, window_bounds = array<i64: 16, 1>}, {transform_indices = @transform_3, window_bounds = array<i64: 16, 8>}]} {
    %c0 = arith.constant 0 : index
    %c0_0 = arith.constant 0 : index
    %0 = vector.load %arg1[%c0, %c0_0] : memref<8x64xf32, #tpu.memory_space<vmem>>, vector<8x64xf32>
    %1 = arith.truncf %0 : vector<8x64xf32> to vector<8x64xbf16>
    %c0_1 = arith.constant 0 : index
    %c0_2 = arith.constant 0 : index
    %2 = vector.load %arg2[%c0_1, %c0_2] : memref<16x64xbf16, #tpu.memory_space<vmem>>, vector<16x64xbf16>
    %3 = tpu.transpose %1, [1, 0] : vector<8x64xbf16> -> vector<64x8xbf16>
    %cst = arith.constant dense<0.000000e+00> : vector<16x8xf32>
    %4 = tpu.matmul %2, %3, %cst {dimension_numbers = #tpu.dot_dimension_numbers<[1], [0], [0], [1], [0, 0, 1, 1], [], []>} : vector<16x64xbf16>, vector<64x8xbf16>, vector<16x8xf32> -> vector<16x8xf32>
    %c0_3 = arith.constant 0 : index
    %c0_4 = arith.constant 0 : index
    %5 = vector.load %arg3[%c0_3, %c0_4] : memref<16x1xf32, #tpu.memory_space<vmem>>, vector<16x1xf32>
    %6 = vector.broadcast %5 : vector<16x1xf32> to vector<16x8xf32>
    %7 = arith.addf %4, %6 : vector<16x8xf32>
    %c0_5 = arith.constant 0 : index
    %c0_6 = arith.constant 0 : index
    %8 = vector.load %arg4[%c0_5, %c0_6] : memref<16x8xf32, #tpu.memory_space<vmem>>, vector<16x8xf32>
    tpu.vector_store %arg4[%c0_5, %c0_6], %7 {strides = array<i32>} : memref<16x8xf32, #tpu.memory_space<vmem>>, vector<16x8xf32>,
    return
  }
  func.func @transform_0(%arg0: i32) -> (i32, i32) {
    %c0_i32 = arith.constant 0 : i32
    %c0_i32_0 = arith.constant 0 : i32
    return %arg0, %c0_i32 : i32, i32
  }
  func.func @transform_1(%arg0: i32) -> (i32, i32) {
    %c0_i32 = arith.constant 0 : i32
    %c0_i32_0 = arith.constant 0 : i32
    %c0_i32_1 = arith.constant 0 : i32
    return %c0_i32, %c0_i32_0 : i32, i32
  }
  func.func @transform_2(%arg0: i32) -> (i32, i32) {
    %c0_i32 = arith.constant 0 : i32
    %c0_i32_0 = arith.constant 0 : i32
    %c0_i32_1 = arith.constant 0 : i32
    return %c0_i32, %c0_i32_0 : i32, i32
  }
  func.func @transform_3(%arg0: i32) -> (i32, i32) {
    %c0_i32 = arith.constant 0 : i32
    %c0_i32_0 = arith.constant 0 : i32
    return %c0_i32, %arg0 : i32, i32
  }
}

</mosaic_0001>

<llo_original>
// kernel: tpu_custom_call.1
$region0: #{tpu_custom_call.1}
  #allocation0 [shape = 'u32[]', space=smem, size = 0x4, offset = 0x4, fixed_abs, tag = 'smem constant byte address 0x4 - core index']
  #allocation1 [shape = 'u32[144,128]{1,0:T(1,128)}', space=vmem, size = 0x12000, scoped, tag = 'internal scratch']
  %s0 = inlined_call_operand.vmem [shape: f32[8,64], index: 0, kind: input, shape index: {}]
  %s1 = inlined_call_operand.vmem [shape: bf16[16,64], index: 1, kind: input, shape index: {}]
  %s2 = inlined_call_operand.vmem [shape: f32[16,1], index: 2, kind: input, shape index: {}]
  %s3 = inlined_call_operand.vmem [shape: f32[16,8], index: 3, kind: output, shape index: {}]
  %s4 = sld [smem:[#allocation0]]
  $region22: #{tpu_custom_call.1} parent=0
    _
  %s6 = ssub.s32 1, %s4
  %s7 = scalar_select 0, %s6, %s4
  // Predicated region
  $region2: #{tpu_custom_call.1} parent=0 // pred_check
    _
  $region3: #{tpu_custom_call.1} parent=0 // pred_check_branch
    %9 = sbr.rel (0) target = $region5
  $region4: #{tpu_custom_call.1} parent=0 // pred_region
    _
  $region5: #{tpu_custom_call.1} parent=0 // pred_fallthru
    _
  // Predicated region
  $region6: #{tpu_custom_call.1} parent=0 // pred_check
    _
  $region7: #{tpu_custom_call.1} parent=0 // pred_check_branch
    %11 = sbr.rel (0) target = $region9
  $region8: #{tpu_custom_call.1} parent=0 // pred_region
    _
  $region9: #{tpu_custom_call.1} parent=0 // pred_fallthru
    _
  // Predicated region
  $region10: #{tpu_custom_call.1} parent=0 // pred_check
    _
  $region11: #{tpu_custom_call.1} parent=0 // pred_check_branch
    %13 = sbr.rel (0) target = $region13
  $region12: #{tpu_custom_call.1} parent=0 // pred_region
    _
  $region13: #{tpu_custom_call.1} parent=0 // pred_fallthru
    _
  %v15 = vld [vmem:[%s0] sm:$0xff]
  %v16 = vpack.c.bf16 %v15, %v15
  %v17 = vld [vmem:[%s1] sm:$0xf]
  %v18 = vld [vmem:[%s1 + $0x4] sm:$0xf]
  %v19 = vld [vmem:[%s2] sm:$0xff]
  %v20 = vld [vmem:[%s2 + $0x8] sm:$0xff]
  %22 = vset.pattern.permute.xlu0 0
  %23 = vperm.xlu0 %22, %v19
  %v24 = vpop.permute.xlu0 %23
  %27 = vset.pattern.permute.xlu0 0
  %28 = vperm.xlu0 %27, %v20
  %v29 = vpop.permute.xlu0 %28
  %v33 = vunpack.c.l.b16 %v17
  %v34 = vunpack.c.l.b16 %v18
  %v35 = vpack.c.b16 %v34, %v33
  %vm36 = vcmask 523264
  %v38 = vsel %vm36, %v35, 0
  %v41 = vsel %vm36, %v16, 0
  %43 = vmatprep.subr.bf16.mxu0 0
  %44 = vmatpush1.bf16.xpose.msra.mxu0 0
  %45 = vmatprep.subr.bf16.mxu0 0
  %46 = vmatpush1.bf16.xpose.msra.mxu0 0
  %47 = vmatprep.subr.bf16.mxu0 0
  %48 = vmatpush1.bf16.xpose.msra.mxu0 0
  %49 = vmatprep.subr.bf16.mxu0 0
  %50 = vmatpush1.bf16.xpose.msra.mxu0 0
  %51 = vmatprep.subr.bf16.mxu0 0
  %52 = vmatpush1.bf16.xpose.msra.mxu0 0
  %53 = vmatprep.subr.bf16.mxu0 0
  %54 = vmatpush1.bf16.xpose.msra.mxu0 0
  %55 = vmatprep.subr.bf16.mxu0 0
  %56 = vmatpush1.bf16.xpose.msra.mxu0 0
  %57 = vmatprep.subr.bf16.mxu0 0
  %58 = vmatpush1.bf16.xpose.msra.mxu0 %v41
  %59 = vmatprep.subr.bf16.mxu0 0
  %60 = vmatpush2.bf16.xpose.msra.mxu0 0
  %61 = vmatprep.subr.bf16.mxu0 0
  %62 = vmatpush2.bf16.xpose.msra.mxu0 0
  %63 = vmatprep.subr.bf16.mxu0 0
  %64 = vmatpush2.bf16.xpose.msra.mxu0 0
  %65 = vmatprep.subr.bf16.mxu0 0
  %66 = vmatpush2.bf16.xpose.msra.mxu0 0
  %67 = vmatprep.subr.bf16.mxu0 0
  %68 = vmatpush2.bf16.xpose.msra.mxu0 0
  %69 = vmatprep.subr.bf16.mxu0 0
  %70 = vmatpush2.bf16.xpose.msra.mxu0 0
  %71 = vmatprep.subr.bf16.mxu0 0
  %72 = vmatpush2.bf16.xpose.msra.mxu0 0
  %73 = vmatprep.subr.bf16.mxu0 0
  %74 = vmatpush2.bf16.xpose.msra.mxu0 0
  %75 = vmatprep.mubr.bf16.mxu0 0
  %76 = vmatmul.mubr.bf16.gmra.mxu0 %v38
  %v77 = vpop.f32.mrf.mxu0
  %v78 = vadd.f32 %v24, %v77
  %v79 = vpop.f32.mrf.mxu0
  %v80 = vpop.f32.mrf.mxu0
  %v81 = vadd.f32 %v29, %v80
  %v82 = vpop.f32.mrf.mxu0
  %83 = vdwg.mxu0
  %vm84 = vcmask 64512
  %85 = vst.msk [vmem:[%s3] sm:$0xff] %vm84, %v78
  %86 = vst.msk [vmem:[%s3 + $0x8] sm:$0xff] %vm84, %v81
  // Predicated region
  $region14: #{tpu_custom_call.1} parent=0 // pred_check
    _
  $region15: #{tpu_custom_call.1} parent=0 // pred_check_branch
    %88 = sbr.rel (0) target = $region17
  $region16: #{tpu_custom_call.1} parent=0 // pred_region
    _
  $region17: #{tpu_custom_call.1} parent=0 // pred_fallthru
    _
  // Predicated region
  $region18: #{tpu_custom_call.1} parent=0 // pred_check
    _
  $region19: #{tpu_custom_call.1} parent=0 // pred_check_branch
    %90 = sbr.rel (0) target = $region21
  $region20: #{tpu_custom_call.1} parent=0 // pred_region
    _
  $region21: #{tpu_custom_call.1} parent=0 // pred_fallthru
    _

</llo_original>
